<compile_context>
chip_gen: v5e
topology: v5e:2x2
jax: 0.10.0
libtpu: 0.0.40
codegen_flags: <defaults>
</compile_context>

<pallas_src>
import jax
import jax.numpy as jnp
from jax.experimental import pallas as pl
from jax.experimental.pallas import tpu as pltpu


_SMALL_BYTES_THRESHOLD = 1 << 20   # below this a fused XLA slice+stack wins
_VMEM_BUDGET_BYTES = 8 << 20       # double-buffered footprint target (all gens)


def _combine_kernel(*refs):
    """Concatenate the N (tile_b, min_size) input tiles along the lane axis and
    issue a single lane-dense store into the (tile_b, N*min_size) output."""
    out_ref = refs[-1]
    in_refs = refs[:-1]
    out_ref[...] = jnp.concatenate([r[...] for r in in_refs], axis=-1)


def _pallas_combine(slices, B, N, min_size, dtype):
    itemsize = jnp.dtype(dtype).itemsize
    # Per batch-row, double-buffered footprint: 2x (N inputs) + 2x output.
    per_row = 4 * N * min_size * itemsize
    tile_b = max(1, _VMEM_BUDGET_BYTES // max(per_row, 1))
    if tile_b >= B:
        tile_b = B                          # whole batch fits: one grid step
    else:
        tile_b = max(8, (tile_b // 8) * 8)  # sublane-aligned partial-batch tile

    grid = (pl.cdiv(B, tile_b),)

    def _in_map(i):
        return (i, 0)

    in_specs = [pl.BlockSpec((tile_b, min_size), _in_map) for _ in range(N)]
    out_specs = pl.BlockSpec((tile_b, N * min_size), _in_map)

    out2d = pl.pallas_call(
        _combine_kernel,
        out_shape=jax.ShapeDtypeStruct((B, N * min_size), dtype),
        grid=grid,
        in_specs=in_specs,
        out_specs=out_specs,
        compiler_params=pltpu.CompilerParams(
            dimension_semantics=("parallel",)),
    )(*slices)
    # Free reshape: concat-along-lanes is exactly stack(dim=1), flattened.
    return out2d.reshape(B, N, min_size)


def overlays_combiner(inputs, use_pallas=None):
    """JAX/Pallas equivalent of OverlaysCombiner.forward."""
    # Single-tensor, <3-dim path: pure shape glue (unsqueeze(2)), no kernel.
    if isinstance(inputs, jnp.ndarray) and inputs.ndim < 3:
        return jnp.expand_dims(inputs, 2)

    # A >=3-D tensor iterates along dim 0, exactly like the PyTorch list-comp.
    if isinstance(inputs, jnp.ndarray):
        inputs = [inputs[i] for i in range(inputs.shape[0])]

    overlays = list(inputs)
    N = len(overlays)
    B = int(overlays[0].shape[0])
    min_size = min(int(o.shape[1]) for o in overlays)
    dtype = jnp.result_type(*overlays)

    # Non-2D overlays have no tuned kernel path; fall back to fused XLA.
    if any(o.ndim != 2 for o in overlays):
        return jnp.stack([o[:, o.shape[1] - min_size:].astype(dtype)
                          for o in overlays], axis=1)

    # Fetch only the trailing min_size columns (static slice): cuts HBM bytes
    # read by the kernel from sum(S_i) down to N*min_size per batch row.
    slices = [o[:, o.shape[1] - min_size:].astype(dtype) for o in overlays]

    out_bytes = B * N * min_size * jnp.dtype(dtype).itemsize
    if use_pallas is None:
        use_pallas = out_bytes >= _SMALL_BYTES_THRESHOLD
    if not use_pallas:
        # Launch overhead dominates for tiny copies; XLA fuses slice+stack.
        return jnp.stack(slices, axis=1)

    return _pallas_combine(slices, B, N, min_size, dtype)


def _reference(inputs):
    if isinstance(inputs, jnp.ndarray) and inputs.ndim < 3:
        return inputs[:, :, None]
    overlays = ([inputs[i] for i in range(inputs.shape[0])]
                if isinstance(inputs, jnp.ndarray) else list(inputs))
    min_size = min(int(o.shape[1]) for o in overlays)
    return jnp.stack([o[:, o.shape[1] - min_size:] for o in overlays], axis=1)


if __name__ == "__main__":
    key = jax.random.PRNGKey(0)
    k1, k2, k3, k4, k5, k6, k7, k8, k9 = jax.random.split(key, 9)

    # --- Case 1: tiny overlays (the module's typical use), Pallas path
    # forced so the kernel itself is exercised. ------------------------------
    B = 2
    overlays = [
        jax.random.normal(k1, (B, 16), dtype=jnp.float32),
        jax.random.normal(k2, (B, 12), dtype=jnp.float32),
        jax.random.normal(k3, (B, 8), dtype=jnp.float32),
        jax.random.normal(k4, (B, 16), dtype=jnp.float32),
    ]
    out = jax.block_until_ready(overlays_combiner(overlays, use_pallas=True))
    ref = _reference(overlays)
    assert out.shape == (B, len(overlays), 8), out.shape
    assert jnp.allclose(out, ref), "mismatch vs reference stack/slice (case 1)"

    # Auto dispatch (small -> plain XLA path) must agree too.
    out_auto = jax.block_until_ready(overlays_combiner(overlays))
    assert jnp.allclose(out_auto, ref)

    # --- Case 2: moderately sized f32 overlays through the Pallas path. -----
    B2 = 64
    overlays2 = [
        jax.random.normal(k5, (B2, 384), dtype=jnp.float32),
        jax.random.normal(k6, (B2, 256), dtype=jnp.float32),
        jax.random.normal(k7, (B2, 320), dtype=jnp.float32),
    ]
    out2 = jax.block_until_ready(overlays_combiner(overlays2, use_pallas=True))
    assert out2.shape == (B2, 3, 256), out2.shape
    assert jnp.allclose(out2, _reference(overlays2)), "mismatch (case 2)"

    # --- Case 3: bf16 overlays, lane-aligned min_size. -----------------------
    B3 = 16
    overlays3 = [
        jax.random.normal(k8, (B3, 256), dtype=jnp.bfloat16),
        jax.random.normal(k9, (B3, 128), dtype=jnp.bfloat16),
    ]
    out3 = jax.block_until_ready(overlays_combiner(overlays3, use_pallas=True))
    assert out3.shape == (B3, 2, 128), out3.shape
    assert jnp.array_equal(out3, _reference(overlays3)), "mismatch (case 3)"

    # --- Case 4: <3-dim single-tensor path (plain-JAX unsqueeze glue). -------
    x2d = jax.random.normal(key, (B, 16), dtype=jnp.float32)
    out4 = jax.block_until_ready(overlays_combiner(x2d))
    assert out4.shape == (B, 16, 1)
    assert jnp.allclose(out4, _reference(x2d))

    print("KERNEL_OK")
</pallas_src>

<mosaic_0001>
module attributes {stable_mosaic.version = 11 : i64} {
  func.func @_combine_kernel(%arg0: i32, %arg1: memref<2x8xf32, #tpu.memory_space<vmem>>, %arg2: memref<2x8xf32, #tpu.memory_space<vmem>>, %arg3: memref<2x8xf32, #tpu.memory_space<vmem>>, %arg4: memref<2x8xf32, #tpu.memory_space<vmem>>, %arg5: memref<2x32xf32, #tpu.memory_space<vmem>>) attributes {dimension_semantics = [#tpu.dimension_semantics<parallel>], iteration_bounds = array<i64: 1>, scalar_prefetch = 0 : i64, scratch_operands = 0 : i64, tpu.core_type = #tpu.core_type<tc>, window_params = [{transform_indices = @transform_0, window_bounds = array<i64: 2, 8>}, {transform_indices = @transform_1, window_bounds = array<i64: 2, 8>}, {transform_indices = @transform_2, window_bounds = array<i64: 2, 8>}, {transform_indices = @transform_3, window_bounds = array<i64: 2, 8>}, {transform_indices = @transform_4, window_bounds = array<i64: 2, 32>}]} {
    %c0 = arith.constant 0 : index
    %c0_0 = arith.constant 0 : index
    %0 = vector.load %arg1[%c0, %c0_0] : memref<2x8xf32, #tpu.memory_space<vmem>>, vector<2x8xf32>
    %c0_1 = arith.constant 0 : index
    %c0_2 = arith.constant 0 : index
    %1 = vector.load %arg2[%c0_1, %c0_2] : memref<2x8xf32, #tpu.memory_space<vmem>>, vector<2x8xf32>
    %c0_3 = arith.constant 0 : index
    %c0_4 = arith.constant 0 : index
    %2 = vector.load %arg3[%c0_3, %c0_4] : memref<2x8xf32, #tpu.memory_space<vmem>>, vector<2x8xf32>
    %c0_5 = arith.constant 0 : index
    %c0_6 = arith.constant 0 : index
    %3 = vector.load %arg4[%c0_5, %c0_6] : memref<2x8xf32, #tpu.memory_space<vmem>>, vector<2x8xf32>
    %4 = tpu.concatenate %0, %1, %2, %3 in 1 : vector<2x8xf32>, vector<2x8xf32>, vector<2x8xf32>, vector<2x8xf32> -> vector<2x32xf32>
    %c0_7 = arith.constant 0 : index
    %c0_8 = arith.constant 0 : index
    %5 = vector.load %arg5[%c0_7, %c0_8] : memref<2x32xf32, #tpu.memory_space<vmem>>, vector<2x32xf32>
    tpu.vector_store %arg5[%c0_7, %c0_8], %4 {strides = array<i32>} : memref<2x32xf32, #tpu.memory_space<vmem>>, vector<2x32xf32>,
    return
  }
  func.func @transform_0(%arg0: i32) -> (i32, i32) {
    %c0_i32 = arith.constant 0 : i32
    %c0_i32_0 = arith.constant 0 : i32
    return %arg0, %c0_i32 : i32, i32
  }
  func.func @transform_1(%arg0: i32) -> (i32, i32) {
    %c0_i32 = arith.constant 0 : i32
    %c0_i32_0 = arith.constant 0 : i32
    return %arg0, %c0_i32 : i32, i32
  }
  func.func @transform_2(%arg0: i32) -> (i32, i32) {
    %c0_i32 = arith.constant 0 : i32
    %c0_i32_0 = arith.constant 0 : i32
    return %arg0, %c0_i32 : i32, i32
  }
  func.func @transform_3(%arg0: i32) -> (i32, i32) {
    %c0_i32 = arith.constant 0 : i32
    %c0_i32_0 = arith.constant 0 : i32
    return %arg0, %c0_i32 : i32, i32
  }
  func.func @transform_4(%arg0: i32) -> (i32, i32) {
    %c0_i32 = arith.constant 0 : i32
    %c0_i32_0 = arith.constant 0 : i32
    return %arg0, %c0_i32 : i32, i32
  }
}

</mosaic_0001>

<llo_original>
// kernel: tpu_custom_call.1
$region0: #{tpu_custom_call.1}
  #allocation0 [shape = 'u32[]', space=smem, size = 0x4, offset = 0x4, fixed_abs, tag = 'smem constant byte address 0x4 - core index']
  #allocation1 [shape = 'u32[72,128]{1,0:T(1,128)}', space=vmem, size = 0x9000, scoped, tag = 'internal scratch']
  %s0 = inlined_call_operand.hbm [shape: f32[2,8], index: 0, kind: input, shape index: {}]
  %s1 = inlined_call_operand.hbm [shape: f32[2,8], index: 1, kind: input, shape index: {}]
  %s2 = inlined_call_operand.hbm [shape: f32[2,8], index: 2, kind: input, shape index: {}]
  %s3 = inlined_call_operand.vmem [shape: f32[2,8], index: 3, kind: input, shape index: {}]
  %s4 = inlined_call_operand.hbm [shape: f32[2,32], index: 4, kind: output, shape index: {}]
  %s5 = sld [smem:[#allocation0]]
  $region38: #{tpu_custom_call.1} parent=0
    _
  %s7 = ssub.s32 1, %s5
  %s8 = scalar_select 0, %s7, %s5
  $region1: #{tpu_custom_call.1} parent=0
    #allocation2 [shape = 'u8[1024]{0}', space=vmem, size = 0x400, scoped, tag = 'input window, operand 0, single buffered']
    #allocation3 [shape = 's32[1]{0}', space=sflag, size = 0x4, scoped, tag = 'scoped memory for tpu_custom_call.1']
    #allocation4 [shape = 's32[1]{0}', space=sflag, size = 0x4, scoped, tag = 'scoped memory for tpu_custom_call.1']
    #allocation5 [shape = 'u8[1024]{0}', space=vmem, size = 0x400, scoped, tag = 'input window, operand 1, single buffered']
    #allocation6 [shape = 's32[1]{0}', space=sflag, size = 0x4, scoped, tag = 'scoped memory for tpu_custom_call.1']
    #allocation7 [shape = 'u8[1024]{0}', space=vmem, size = 0x400, scoped, tag = 'input window, operand 2, single buffered']
    #allocation8 [shape = 'u8[1024]{0}', space=vmem, size = 0x400, scoped, tag = 'output window, operand 0, single buffered']
    %9 = vsyncpa [#allocation3], 0
    %10 = vsyncpa [#allocation6], 0
    %11 = vsyncpa [#allocation4], 0
    // Predicated region
    $region2: #{tpu_custom_call.1} parent=1 // pred_check
      _
    $region3: #{tpu_custom_call.1} parent=1 // pred_check_branch
      %13 = sbr.rel (0) target = $region5
    $region4: #{tpu_custom_call.1} parent=1 // pred_region
      %15 = vsyncadd [#allocation3], 0
      %s17 = sshll.u32 %s0, 4
      %s18 = int_to_ptr.hbm [resolvable:$true] %s17
      %s19 = sshll.u32 [#allocation2], 4
      %s20 = int_to_ptr.vmem [resolvable:$true] %s19
      %22 = dma.hbm_to_vmem [thread:$0]  %s18, 32, %s20, [#allocation3]
    $region5: #{tpu_custom_call.1} parent=1 // pred_fallthru
      _
    // Predicated region
    $region6: #{tpu_custom_call.1} parent=1 // pred_check
      _
    $region7: #{tpu_custom_call.1} parent=1 // pred_check_branch
      %24 = sbr.rel (0) target = $region9
    $region8: #{tpu_custom_call.1} parent=1 // pred_region
      %26 = vsyncadd [#allocation6], 0
      %s28 = sshll.u32 %s1, 4
      %s29 = int_to_ptr.hbm [resolvable:$true] %s28
      %s30 = sshll.u32 [#allocation5], 4
      %s31 = int_to_ptr.vmem [resolvable:$true] %s30
      %33 = dma.hbm_to_vmem [thread:$0]  %s29, 32, %s31, [#allocation6]
    $region9: #{tpu_custom_call.1} parent=1 // pred_fallthru
      _
    // Predicated region
    $region10: #{tpu_custom_call.1} parent=1 // pred_check
      _
    $region11: #{tpu_custom_call.1} parent=1 // pred_check_branch
      %35 = sbr.rel (0) target = $region13
    $region12: #{tpu_custom_call.1} parent=1 // pred_region
      %37 = vsyncadd [#allocation6], 0
      %s39 = sshll.u32 %s2, 4
      %s40 = int_to_ptr.hbm [resolvable:$true] %s39
      %s41 = sshll.u32 [#allocation7], 4
      %s42 = int_to_ptr.vmem [resolvable:$true] %s41
      %44 = dma.hbm_to_vmem [thread:$0]  %s40, 32, %s42, [#allocation6]
    $region13: #{tpu_custom_call.1} parent=1 // pred_fallthru
      _
    // Predicated region
    $region14: #{tpu_custom_call.1} parent=1 // pred_check
      _
    $region15: #{tpu_custom_call.1} parent=1 // pred_check_branch
      %46 = sbr.rel (0) target = $region17
    $region16: #{tpu_custom_call.1} parent=1 // pred_region
      _
    $region17: #{tpu_custom_call.1} parent=1 // pred_fallthru
      _
    // Predicated region
    $region18: #{tpu_custom_call.1} parent=1 // pred_check
      _
    $region19: #{tpu_custom_call.1} parent=1 // pred_check_branch
      %48 = sbr.rel (0) target = $region21
    $region20: #{tpu_custom_call.1} parent=1 // pred_region
      %50 = dma.done [#allocation3], 32
    $region21: #{tpu_custom_call.1} parent=1 // pred_fallthru
      _
    // Predicated region
    $region22: #{tpu_custom_call.1} parent=1 // pred_check
      _
    $region23: #{tpu_custom_call.1} parent=1 // pred_check_branch
      %52 = sbr.rel (0) target = $region25
    $region24: #{tpu_custom_call.1} parent=1 // pred_region
      %54 = dma.done [#allocation6], 32
    $region25: #{tpu_custom_call.1} parent=1 // pred_fallthru
      _
    // Predicated region
    $region26: #{tpu_custom_call.1} parent=1 // pred_check
      _
    $region27: #{tpu_custom_call.1} parent=1 // pred_check_branch
      %56 = sbr.rel (0) target = $region29
    $region28: #{tpu_custom_call.1} parent=1 // pred_region
      %58 = dma.done [#allocation6], 32
    $region29: #{tpu_custom_call.1} parent=1 // pred_fallthru
      _
    %v59 = vld [vmem:[#allocation2] sm:$0x3]
    %v60 = vld [vmem:[#allocation5] sm:$0x3]
    %v61 = vld [vmem:[#allocation7] sm:$0x3]
    %v62 = vld [vmem:[%s3] sm:$0x3]
    %64 = vrot.lane.b32.xlu0 %v60, 8
    %v65 = vpop.permute.xlu0 %64
    %68 = vrot.lane.b32.xlu0 %v61, 16
    %v69 = vpop.permute.xlu0 %68
    %72 = vrot.lane.b32.xlu0 %v62, 24
    %v73 = vpop.permute.xlu0 %72
    %vm75 = vcmask 64512
    %v76 = vsel %vm75, %v59, %v65
    %vm77 = vcmask 130048
    %v78 = vsel %vm77, %v76, %v69
    %vm79 = vcmask 195584
    %v80 = vsel %vm79, %v78, %v73
    %vm81 = vcmask 254976
    %82 = vst.msk [vmem:[#allocation8] sm:$0x3] %vm81, %v80
    // Predicated region
    $region30: #{tpu_custom_call.1} parent=1 // pred_check
      _
    $region31: #{tpu_custom_call.1} parent=1 // pred_check_branch
      %84 = sbr.rel (0) target = $region33
    $region32: #{tpu_custom_call.1} parent=1 // pred_region
      %86 = vsyncadd [#allocation4], 0
      %s88 = sshll.u32 [#allocation8], 4
      %s89 = int_to_ptr.vmem [resolvable:$true] %s88
      %s90 = sshll.u32 %s4, 4
      %s91 = int_to_ptr.hbm [resolvable:$true] %s90
      %93 = dma.vmem_to_hbm [thread:$0]  %s89, 32, %s91, [#allocation4]
    $region33: #{tpu_custom_call.1} parent=1 // pred_fallthru
      _
    // Predicated region
    $region34: #{tpu_custom_call.1} parent=1 // pred_check
      _
    $region35: #{tpu_custom_call.1} parent=1 // pred_check_branch
      %95 = sbr.rel (0) target = $region37
    $region36: #{tpu_custom_call.1} parent=1 // pred_region
      %97 = dma.done [#allocation4], 32
    $region37: #{tpu_custom_call.1} parent=1 // pred_fallthru
      _
    %98 = vsyncpa [#allocation3], 1
    %99 = vsyncpa [#allocation6], 1
    %100 = vsyncpa [#allocation4], 1

</llo_original>
